<compile_context>
chip_gen: v5e
topology: v5e:2x2
jax: 0.10.0
libtpu: 0.0.40
codegen_flags: <defaults>
</compile_context>

<pallas_src>
import math
import functools

import jax
import jax.numpy as jnp
from jax.experimental import pallas as pl
from jax.experimental.pallas import tpu as pltpu


# Tile plan: 256 suits the 256x256 MXU on v6e/v7x, decomposes cleanly on
# v5e's 4x128^2 MXUs, and stays inside the scoped-VMEM limits when
# double-buffered.
_TILE_M = 256
_TILE_N = 256
_TILE_K = 256
_VMEM_LIMIT = 32 * 1024 * 1024


def _round_up(x, m):
    return ((x + m - 1) // m) * m


# ----------------------------------------------------------------------------
# fused linear kernel:  y = x @ w + b  [+ relu]  [+ LayerNorm(residual + y)]
# ----------------------------------------------------------------------------
def _linear_kernel(*refs, activation, fuse_ln, eps):
    if fuse_ln:
        x_ref, w_ref, b_ref, r_ref, g_ref, be_ref, o_ref, acc_ref = refs
    else:
        x_ref, w_ref, b_ref, o_ref, acc_ref = refs

    @pl.when(pl.program_id(2) == 0)
    def _():
        acc_ref[...] = jnp.zeros_like(acc_ref)

    # x / w are bf16, accumulation in fp32 on the MXU.
    acc_ref[...] += jnp.dot(x_ref[...], w_ref[...],
                            preferred_element_type=jnp.float32)

    @pl.when(pl.program_id(2) == pl.num_programs(2) - 1)
    def _():
        y = acc_ref[...] + b_ref[...]
        if activation == "relu":
            y = jnp.maximum(y, 0.0)
        if fuse_ln:
            # LayerNorm(residual + y): full row (tn == dout) resident here,
            # statistics in fp32.
            y = y + r_ref[...]
            mean = jnp.mean(y, axis=-1, keepdims=True)
            var = jnp.mean(jnp.square(y - mean), axis=-1, keepdims=True)
            y = (y - mean) * jax.lax.rsqrt(var + eps)
            y = y * g_ref[...] + be_ref[...]
        o_ref[...] = y.astype(o_ref.dtype)


def pallas_linear(x, w, b, activation=None, out_dtype=jnp.bfloat16,
                  residual=None, ln_gamma=None, ln_beta=None, eps=1e-5):
    """y = x @ w + b with w pre-transposed (din, dout) in bf16.

    If `residual` is given, the epilogue computes LayerNorm(residual + y)
    (fp32 statistics) and the output is fp32 (the residual stream)."""
    din, dout = w.shape
    lead = x.shape[:-1]
    x2 = x.reshape(-1, din).astype(jnp.bfloat16)
    m = x2.shape[0]
    fuse_ln = residual is not None

    if m > _TILE_M:
        tm = min((_TILE_M, 128), key=lambda t: _round_up(m, t))
    else:
        tm = _round_up(m, 8)
    tk = _TILE_K if din > 2 * _TILE_K else din
    tn = dout if (fuse_ln or dout <= 2 * _TILE_N) else _TILE_N

    mp, np_, kp = _round_up(m, tm), _round_up(dout, tn), _round_up(din, tk)
    if mp != m or kp != din:
        x2 = jnp.pad(x2, ((0, mp - m), (0, kp - din)))
    if kp != din or np_ != dout:        # never triggers for the GDINO dims
        w = jnp.pad(w, ((0, kp - din), (0, np_ - dout)))
    b2 = b.reshape(1, dout).astype(jnp.float32)
    if np_ != dout:
        b2 = jnp.pad(b2, ((0, 0), (0, np_ - dout)))

    operands = [x2, w, b2]
    in_specs = [
        pl.BlockSpec((tm, tk), lambda i, j, k: (i, k)),
        pl.BlockSpec((tk, tn), lambda i, j, k: (k, j)),
        pl.BlockSpec((1, tn), lambda i, j, k: (0, j)),
    ]
    if fuse_ln:
        out_dtype = jnp.float32
        r2 = residual.reshape(-1, dout).astype(jnp.float32)
        if mp != m:
            r2 = jnp.pad(r2, ((0, mp - m), (0, 0)))
        operands += [r2,
                     ln_gamma.reshape(1, dout).astype(jnp.float32),
                     ln_beta.reshape(1, dout).astype(jnp.float32)]
        in_specs += [pl.BlockSpec((tm, dout), lambda i, j, k: (i, 0)),
                     pl.BlockSpec((1, dout), lambda i, j, k: (0, 0)),
                     pl.BlockSpec((1, dout), lambda i, j, k: (0, 0))]

    grid = (mp // tm, np_ // tn, kp // tk)
    out = pl.pallas_call(
        functools.partial(_linear_kernel, activation=activation,
                          fuse_ln=fuse_ln, eps=eps),
        out_shape=jax.ShapeDtypeStruct((mp, np_), out_dtype),
        grid=grid,
        in_specs=in_specs,
        out_specs=pl.BlockSpec((tm, tn), lambda i, j, k: (i, j)),
        scratch_shapes=[pltpu.VMEM((tm, tn), jnp.float32)],
        compiler_params=pltpu.CompilerParams(
            dimension_semantics=("parallel", "parallel", "arbitrary"),
            vmem_limit_bytes=_VMEM_LIMIT),
    )(*operands)
    if mp != m or np_ != dout:
        out = out[:m, :dout]
    return out.reshape(lead + (dout,))


# ----------------------------------------------------------------------------
# standalone LayerNorm (used for the per-layer `self.norm` intermediate output)
# ----------------------------------------------------------------------------
def _layernorm_kernel(x_ref, g_ref, b_ref, o_ref, *, eps):
    x = x_ref[...].astype(jnp.float32)
    mean = jnp.mean(x, axis=-1, keepdims=True)
    var = jnp.mean(jnp.square(x - mean), axis=-1, keepdims=True)
    y = (x - mean) * jax.lax.rsqrt(var + eps)
    o_ref[...] = (y * g_ref[...] + b_ref[...]).astype(o_ref.dtype)


def pallas_layernorm(x, gamma, beta, eps=1e-5):
    d = x.shape[-1]
    lead = x.shape[:-1]
    x2 = x.reshape(-1, d).astype(jnp.float32)
    n = x2.shape[0]
    tm = _TILE_M if n > _TILE_M else _round_up(n, 8)
    npad = _round_up(n, tm)
    if npad != n:
        x2 = jnp.pad(x2, ((0, npad - n), (0, 0)))
    out = pl.pallas_call(
        functools.partial(_layernorm_kernel, eps=eps),
        out_shape=jax.ShapeDtypeStruct((npad, d), jnp.float32),
        grid=(npad // tm,),
        in_specs=[pl.BlockSpec((tm, d), lambda i: (i, 0)),
                  pl.BlockSpec((1, d), lambda i: (0, 0)),
                  pl.BlockSpec((1, d), lambda i: (0, 0))],
        out_specs=pl.BlockSpec((tm, d), lambda i: (i, 0)),
        compiler_params=pltpu.CompilerParams(
            dimension_semantics=("parallel",),
            vmem_limit_bytes=_VMEM_LIMIT),
    )(x2, gamma.reshape(1, d), beta.reshape(1, d))
    if npad != n:
        out = out[:n]
    return out.reshape(lead + (d,))


# ----------------------------------------------------------------------------
# multi-head attention core (batch-first, heads-batched dot_general)
# ----------------------------------------------------------------------------
def _attention_kernel(*refs, has_kpm, has_mask, scale):
    idx = 0
    q_ref = refs[idx]; idx += 1
    k_ref = refs[idx]; idx += 1
    v_ref = refs[idx]; idx += 1
    kpm_ref = None
    mask_ref = None
    if has_kpm:
        kpm_ref = refs[idx]; idx += 1
    if has_mask:
        mask_ref = refs[idx]; idx += 1
    o_ref = refs[idx]

    # (tq, H, dh) -> (H, tq, dh): heads become the dot_general batch dim.
    qh = jnp.swapaxes(q_ref[0], 0, 1)                    # (H, tq, dh) bf16
    kh = jnp.swapaxes(k_ref[0], 0, 1)                    # (H, lk, dh) bf16
    vh = jnp.swapaxes(v_ref[0], 0, 1)                    # (H, lk, dh) bf16

    s = jax.lax.dot_general(qh, kh, (((2,), (2,)), ((0,), (0,))),
                            preferred_element_type=jnp.float32) * scale
    if has_mask:
        s = s + mask_ref[...][None, :, :]                # (tq, lk) broadcast
    if has_kpm:
        s = s + kpm_ref[0][None, :, :]                   # (1, lk) broadcast
    m = jnp.max(s, axis=-1, keepdims=True)
    p = jnp.exp(s - m)
    p = p * pl.reciprocal(jnp.sum(p, axis=-1, keepdims=True), approx=True)
    out = jax.lax.dot_general(p.astype(jnp.bfloat16), vh,
                              (((2,), (1,)), ((0,), (0,))),
                              preferred_element_type=jnp.float32)  # (H,tq,dh)
    h, tq, dh = out.shape
    # lane-dense (tq, d_model) store
    o_ref[0] = jnp.swapaxes(out, 0, 1).reshape(tq, h * dh).astype(o_ref.dtype)


def pallas_mha_attention(q, k, v, num_heads, key_padding_mask=None,
                         attn_mask=None):
    """Scaled-dot-product MHA core; q/k/v batch-first (bs, L, d) in bf16."""
    bs, lq, d = q.shape
    lk = k.shape[1]
    dh = d // num_heads
    scale = 1.0 / math.sqrt(dh)

    # q-block grid axis (parallel) -> megacore sharding on v7x and pipeline
    # granularity everywhere; single block when the sequence is short.
    if lq <= 512:
        tq, lqp = lq, lq
    else:
        tq = 256
        lqp = _round_up(lq, tq)

    qb = q.astype(jnp.bfloat16)
    am = attn_mask
    if am is not None:
        if am.dtype == jnp.bool_:
            am = jnp.where(am, -1e9, 0.0)
        am = am.astype(jnp.float32)
    if lqp != lq:
        qb = jnp.pad(qb, ((0, 0), (0, lqp - lq), (0, 0)))
        if am is not None:
            am = jnp.pad(am, ((0, lqp - lq), (0, 0)))

    # free (metadata-only) reshape to expose heads
    q4 = qb.reshape(bs, lqp, num_heads, dh)
    k4 = k.astype(jnp.bfloat16).reshape(bs, lk, num_heads, dh)
    v4 = v.astype(jnp.bfloat16).reshape(bs, lk, num_heads, dh)

    has_kpm = key_padding_mask is not None
    has_mask = am is not None
    operands = [q4, k4, v4]
    in_specs = [
        pl.BlockSpec((1, tq, num_heads, dh), lambda b, i: (b, i, 0, 0)),
        pl.BlockSpec((1, lk, num_heads, dh), lambda b, i: (b, 0, 0, 0)),
        pl.BlockSpec((1, lk, num_heads, dh), lambda b, i: (b, 0, 0, 0)),
    ]
    if has_kpm:
        kpm = jnp.where(key_padding_mask, -1e9, 0.0).astype(jnp.float32)
        operands.append(kpm.reshape(bs, 1, lk))
        in_specs.append(pl.BlockSpec((1, 1, lk), lambda b, i: (b, 0, 0)))
    if has_mask:
        operands.append(am)                               # (lqp, lk) additive
        in_specs.append(pl.BlockSpec((tq, lk), lambda b, i: (i, 0)))

    out = pl.pallas_call(
        functools.partial(_attention_kernel, has_kpm=has_kpm,
                          has_mask=has_mask, scale=scale),
        out_shape=jax.ShapeDtypeStruct((bs, lqp, d), jnp.bfloat16),
        grid=(bs, lqp // tq),
        in_specs=in_specs,
        out_specs=pl.BlockSpec((1, tq, d), lambda b, i: (b, i, 0)),
        compiler_params=pltpu.CompilerParams(
            dimension_semantics=("parallel", "parallel"),
            vmem_limit_bytes=_VMEM_LIMIT),
    )(*operands)
    if lqp != lq:
        out = out[:, :lq]
    return out


# ----------------------------------------------------------------------------
# deformable (MSDeform) attention: Pallas matmuls + plain-JAX bilinear gather
# ----------------------------------------------------------------------------
def _bilinear_sample(v_flat, hh, ww, gx, gy):
    # v_flat: (bs, H, HW, Dh); gx/gy: (bs, H, nq, np) pixel coords
    # (align_corners=False, zero padding).
    x0 = jnp.floor(gx)
    y0 = jnp.floor(gy)
    lx, ly = gx - x0, gy - y0
    hx, hy = 1.0 - lx, 1.0 - ly

    def gather(xi, yi):
        valid = ((xi >= 0) & (xi <= ww - 1) & (yi >= 0) & (yi <= hh - 1)
                 ).astype(jnp.float32)
        xc = jnp.clip(xi, 0, ww - 1).astype(jnp.int32)
        yc = jnp.clip(yi, 0, hh - 1).astype(jnp.int32)
        idx = yc * ww + xc                                 # (bs, H, nq, np)
        b_, h_, nq_, np_ = idx.shape
        dh_ = v_flat.shape[-1]
        idxf = jnp.broadcast_to(idx.reshape(b_, h_, nq_ * np_)[..., None],
                                (b_, h_, nq_ * np_, dh_))
        g = jnp.take_along_axis(v_flat, idxf, axis=2
                                ).reshape(b_, h_, nq_, np_, dh_)
        return g.astype(jnp.float32) * valid[..., None]

    v00 = gather(x0, y0)
    v01 = gather(x0 + 1, y0)
    v10 = gather(x0, y0 + 1)
    v11 = gather(x0 + 1, y0 + 1)
    return (v00 * (hx * hy)[..., None] + v01 * (lx * hy)[..., None]
            + v10 * (hx * ly)[..., None] + v11 * (lx * ly)[..., None])


def ms_deform_core(value, spatial_shapes, sampling_locations, attention_weights):
    # TODO(synk): the bilinear grid-sample gather is data-dependent; a Pallas
    # DMA-gather kernel (scalar-prefetched indices + make_async_copy) is the
    # next step — kept in plain JAX here.
    bs, _, num_heads, dh = value.shape
    nl = sampling_locations.shape[3]
    grids = 2.0 * sampling_locations - 1.0
    nq = sampling_locations.shape[1]
    out = jnp.zeros((bs, num_heads, nq, dh), jnp.float32)
    start = 0
    for lvl in range(nl):
        hh, ww = spatial_shapes[lvl]
        v_l = value[:, start:start + hh * ww]              # (bs, HW, H, Dh)
        start += hh * ww
        v_flat = jnp.transpose(v_l, (0, 2, 1, 3))          # (bs, H, HW, Dh)
        g = grids[:, :, :, lvl]                            # (bs, nq, H, np, 2)
        gx = (g[..., 0] + 1.0) * ww / 2.0 - 0.5
        gy = (g[..., 1] + 1.0) * hh / 2.0 - 0.5
        gx = jnp.transpose(gx, (0, 2, 1, 3))               # (bs, H, nq, np)
        gy = jnp.transpose(gy, (0, 2, 1, 3))
        sampled = _bilinear_sample(v_flat, hh, ww, gx, gy)  # (bs,H,nq,np,Dh)
        w = jnp.transpose(attention_weights[:, :, :, lvl], (0, 2, 1, 3))
        out = out + jnp.sum(sampled * w[..., None], axis=3)
    return jnp.transpose(out, (0, 2, 1, 3)).reshape(bs, nq, num_heads * dh)


def ms_deform_attn_forward(p, query, reference_points, value, spatial_shapes,
                           key_padding_mask, num_heads, num_levels, num_points,
                           residual, ln_gamma, ln_beta):
    bs, nq, d = query.shape
    lv = value.shape[1]
    dh = d // num_heads

    v = pallas_linear(value, p["value_proj"]["w"], p["value_proj"]["b"])
    if key_padding_mask is not None:
        v = jnp.where(key_padding_mask[..., None], 0.0, v)
    v = v.reshape(bs, lv, num_heads, dh)

    # fused sampling_offsets + attention_weights projection (same input)
    oa = pallas_linear(query, p["offs_aw"]["w"], p["offs_aw"]["b"],
                       out_dtype=jnp.float32)
    n_off = num_heads * num_levels * num_points * 2
    offs = oa[..., :n_off].reshape(bs, nq, num_heads, num_levels, num_points, 2)
    aw = oa[..., n_off:]
    aw = jax.nn.softmax(aw.reshape(bs, nq, num_heads, num_levels * num_points),
                        axis=-1)
    aw = aw.reshape(bs, nq, num_heads, num_levels, num_points)

    rp = reference_points
    if rp.shape[-1] == 4:
        sampling_locations = (rp[:, :, None, :, None, :2]
                              + offs / num_points * rp[:, :, None, :, None, 2:] * 0.5)
    else:
        norm = jnp.array([[w_, h_] for (h_, w_) in spatial_shapes], jnp.float32)
        sampling_locations = (rp[:, :, None, :, None, :]
                              + offs / norm[None, None, None, :, None, :])

    out = ms_deform_core(v, spatial_shapes, sampling_locations, aw)
    # output_proj fused with residual add + norm1
    return pallas_linear(out, p["output_proj"]["w"], p["output_proj"]["b"],
                         residual=residual, ln_gamma=ln_gamma, ln_beta=ln_beta)


# ----------------------------------------------------------------------------
# sine position embedding (operates on the last dim; layout-agnostic)
# ----------------------------------------------------------------------------
def gen_sineembed_for_position(pos, d_model):
    scale = 2.0 * math.pi
    half = d_model // 2
    dim_t = jnp.arange(half, dtype=jnp.float32)
    dim_t = 10000.0 ** (2.0 * (dim_t // 2) / half)

    def emb(coord):
        p = coord[..., None] * scale / dim_t
        return jnp.stack([jnp.sin(p[..., 0::2]), jnp.cos(p[..., 1::2])],
                         axis=-1).reshape(p.shape[:-1] + (half,))

    pos_x = emb(pos[..., 0])
    pos_y = emb(pos[..., 1])
    if pos.shape[-1] == 4:
        pos_w = emb(pos[..., 2])
        pos_h = emb(pos[..., 3])
        return jnp.concatenate([pos_y, pos_x, pos_w, pos_h], axis=-1)
    return jnp.concatenate([pos_y, pos_x], axis=-1)


# ----------------------------------------------------------------------------
# decoder layer / decoder forward (batch-first internal layout)
# ----------------------------------------------------------------------------
def decoder_layer_forward(lp, tgt, query_pos, reference_points_input,
                          memory_text, text_attention_mask, memory,
                          memory_key_padding_mask, spatial_shapes,
                          num_heads, num_levels, num_points, self_attn_mask=None):
    d = tgt.shape[-1]
    # 1. self attention: fused q+k projection, out_proj fused with norm2
    qk_in = tgt + query_pos
    qk = pallas_linear(qk_in, lp["self_attn"]["wqk"], lp["self_attn"]["bqk"])
    v = pallas_linear(tgt, lp["self_attn"]["wv"], lp["self_attn"]["bv"])
    attn = pallas_mha_attention(qk[..., :d], qk[..., d:], v, num_heads,
                                attn_mask=self_attn_mask)
    tgt = pallas_linear(attn, lp["self_attn"]["out_proj"]["w"],
                        lp["self_attn"]["out_proj"]["b"],
                        residual=tgt, ln_gamma=lp["norm2"]["g"],
                        ln_beta=lp["norm2"]["b"])
    # 2. cross attention to text: fused k+v projection, out_proj + catext_norm
    q = pallas_linear(tgt + query_pos, lp["ca_text"]["wq"], lp["ca_text"]["bq"])
    kv = pallas_linear(memory_text, lp["ca_text"]["wkv"], lp["ca_text"]["bkv"])
    attn = pallas_mha_attention(q, kv[..., :d], kv[..., d:], num_heads,
                                key_padding_mask=text_attention_mask)
    tgt = pallas_linear(attn, lp["ca_text"]["out_proj"]["w"],
                        lp["ca_text"]["out_proj"]["b"],
                        residual=tgt, ln_gamma=lp["catext_norm"]["g"],
                        ln_beta=lp["catext_norm"]["b"])
    # 3. deformable cross attention to image memory (output_proj + norm1 fused)
    tgt = ms_deform_attn_forward(
        lp["cross_attn"], tgt + query_pos, reference_points_input, memory,
        spatial_shapes, memory_key_padding_mask, num_heads, num_levels,
        num_points, residual=tgt, ln_gamma=lp["norm1"]["g"],
        ln_beta=lp["norm1"]["b"])
    # 4. FFN: relu fused into linear1, residual + norm3 fused into linear2
    h = pallas_linear(tgt, lp["linear1"]["w"], lp["linear1"]["b"],
                      activation="relu")
    tgt = pallas_linear(h, lp["linear2"]["w"], lp["linear2"]["b"],
                        residual=tgt, ln_gamma=lp["norm3"]["g"],
                        ln_beta=lp["norm3"]["b"])
    return tgt


def transformer_decoder_forward(params, cfg, tgt, memory, refpoints_unsigmoid,
                                spatial_shapes, valid_ratios, memory_text,
                                text_attention_mask, memory_key_padding_mask=None,
                                tgt_mask=None):
    d_model = cfg["d_model"]
    num_heads = cfg["num_heads"]
    num_levels = cfg["num_levels"]
    num_points = cfg["num_points"]

    # convert PyTorch seq-major inputs to batch-first once (no per-layer swaps)
    tgt_b = jnp.swapaxes(tgt, 0, 1)                            # (bs, nq, d)
    memory_b = jnp.swapaxes(memory, 0, 1)                      # (bs, hw, d)
    ref_b = jax.nn.sigmoid(jnp.swapaxes(refpoints_unsigmoid, 0, 1))  # (bs,nq,dq)
    ref_points = [ref_b]

    # bbox_embed is None -> reference points are constant across layers, so
    # the sine embedding and ref_point_head MLP are hoisted out of the loop.
    if ref_b.shape[-1] == 4:
        vr = jnp.concatenate([valid_ratios, valid_ratios], axis=-1)
    else:
        vr = valid_ratios
    reference_points_input = ref_b[:, :, None, :] * vr[:, None, :, :]
    query_sine_embed = gen_sineembed_for_position(
        reference_points_input[:, :, 0, :], d_model)
    h = pallas_linear(query_sine_embed, params["ref_point_head"]["l1"]["w"],
                      params["ref_point_head"]["l1"]["b"], activation="relu")
    query_pos = pallas_linear(h, params["ref_point_head"]["l2"]["w"],
                              params["ref_point_head"]["l2"]["b"],
                              out_dtype=jnp.float32)           # (bs, nq, d)

    output = tgt_b
    intermediate = []
    for lp in params["layers"]:
        output = decoder_layer_forward(lp, output, query_pos,
                                       reference_points_input, memory_text,
                                       text_attention_mask, memory_b,
                                       memory_key_padding_mask, spatial_shapes,
                                       num_heads, num_levels, num_points,
                                       self_attn_mask=tgt_mask)
        intermediate.append(pallas_layernorm(output, params["norm"]["g"],
                                             params["norm"]["b"]))
    # already batch-first == the transposed torch return
    return intermediate, ref_points


# ----------------------------------------------------------------------------
# deterministic parameter initialization
#   weights pre-transposed (din, dout) in bf16 (MXU operands), pre-split /
#   pre-fused so no per-call slicing; biases / LN params fp32.
# ----------------------------------------------------------------------------
def _init_linear(key, din, dout, scale=0.05):
    kw, kb = jax.random.split(key)
    return {"w": (jax.random.normal(kw, (din, dout), jnp.float32) * scale
                  ).astype(jnp.bfloat16),
            "b": jax.random.normal(kb, (dout,), jnp.float32) * scale}


def _init_self_mha(key, d, scale=0.05):
    k1, k2, k3 = jax.random.split(key, 3)
    return {"wqk": (jax.random.normal(k1, (d, 2 * d), jnp.float32) * scale
                    ).astype(jnp.bfloat16),
            "bqk": jnp.zeros((2 * d,), jnp.float32),
            "wv": (jax.random.normal(k2, (d, d), jnp.float32) * scale
                   ).astype(jnp.bfloat16),
            "bv": jnp.zeros((d,), jnp.float32),
            "out_proj": _init_linear(k3, d, d, scale)}


def _init_cross_mha(key, d, scale=0.05):
    k1, k2, k3 = jax.random.split(key, 3)
    return {"wq": (jax.random.normal(k1, (d, d), jnp.float32) * scale
                   ).astype(jnp.bfloat16),
            "bq": jnp.zeros((d,), jnp.float32),
            "wkv": (jax.random.normal(k2, (d, 2 * d), jnp.float32) * scale
                    ).astype(jnp.bfloat16),
            "bkv": jnp.zeros((2 * d,), jnp.float32),
            "out_proj": _init_linear(k3, d, d, scale)}


def _init_layernorm(d):
    return {"g": jnp.ones((d,), jnp.float32), "b": jnp.zeros((d,), jnp.float32)}


def _init_layer(key, d, dffn, heads, levels, points):
    ks = jax.random.split(key, 7)
    return {
        "self_attn": _init_self_mha(ks[0], d),
        "ca_text": _init_cross_mha(ks[1], d),
        "cross_attn": {
            # sampling_offsets (H*L*P*2) and attention_weights (H*L*P) fused
            "offs_aw": _init_linear(ks[2], d, heads * levels * points * 3),
            "value_proj": _init_linear(ks[3], d, d),
            "output_proj": _init_linear(ks[4], d, d),
        },
        "linear1": _init_linear(ks[5], d, dffn),
        "linear2": _init_linear(ks[6], dffn, d),
        "norm1": _init_layernorm(d),
        "norm2": _init_layernorm(d),
        "catext_norm": _init_layernorm(d),
        "norm3": _init_layernorm(d),
    }


def init_decoder_params(key, num_layers, d_model, d_feedforward, d_query,
                        num_heads, num_levels, num_points):
    ks = jax.random.split(key, num_layers + 2)
    layers = [_init_layer(ks[i], d_model, d_feedforward, num_heads, num_levels,
                          num_points) for i in range(num_layers)]
    ref_in = d_query // 2 * d_model
    return {
        "layers": layers,
        "norm": _init_layernorm(d_model),
        "ref_point_head": {"l1": _init_linear(ks[num_layers], ref_in, d_model),
                           "l2": _init_linear(ks[num_layers + 1], d_model, d_model)},
    }


# ----------------------------------------------------------------------------
if __name__ == "__main__":
    num_layers = 2
    d_model = 32
    d_feedforward = 64
    d_query = 4
    num_heads = 4
    num_levels = 2
    num_points = 2
    nq, bs, lt = 8, 2, 6
    spatial_shapes = [(8, 8), (4, 4)]        # (H, W) per level, static
    hw = sum(h * w for h, w in spatial_shapes)

    key = jax.random.PRNGKey(0)
    ks = jax.random.split(key, 8)
    tgt = jax.random.normal(ks[0], (nq, bs, d_model), jnp.float32)
    memory = jax.random.normal(ks[1], (hw, bs, d_model), jnp.float32)
    refpoints_unsigmoid = jax.random.normal(ks[2], (nq, bs, d_query), jnp.float32)
    valid_ratios = jax.random.uniform(ks[3], (bs, num_levels, 2),
                                      minval=0.5, maxval=1.0, dtype=jnp.float32)
    memory_text = jax.random.normal(ks[4], (bs, lt, d_model), jnp.float32)
    text_attention_mask = jnp.array([[False, False, False, False, True, True],
                                     [False, False, False, False, False, False]])

    params = init_decoder_params(ks[5], num_layers, d_model, d_feedforward,
                                 d_query, num_heads, num_levels, num_points)
    cfg = dict(d_model=d_model, num_heads=num_heads,
               num_levels=num_levels, num_points=num_points)

    intermediate, ref_pts = transformer_decoder_forward(
        params, cfg, tgt, memory, refpoints_unsigmoid, spatial_shapes,
        valid_ratios, memory_text, text_attention_mask,
        memory_key_padding_mask=None, tgt_mask=None)

    for arr in intermediate + ref_pts:
        jax.block_until_ready(arr)
    assert all(o.shape == (bs, nq, d_model) for o in intermediate)
    assert ref_pts[0].shape == (bs, nq, d_query)
    assert not any(bool(jnp.isnan(o).any()) for o in intermediate)
    print("KERNEL_OK")
</pallas_src>

<mosaic_0001>
module attributes {stable_mosaic.version = 11 : i64} {
  func.func @_linear_kernel(%arg0: i32, %arg1: i32, %arg2: i32, %arg3: memref<16x64xbf16, #tpu.memory_space<vmem>>, %arg4: memref<64x32xbf16, #tpu.memory_space<vmem>>, %arg5: memref<1x32xf32, #tpu.memory_space<vmem>>, %arg6: memref<16x32xbf16, #tpu.memory_space<vmem>>, %arg7: memref<16x32xf32, #tpu.memory_space<vmem>>) attributes {dimension_semantics = [#tpu.dimension_semantics<parallel>, #tpu.dimension_semantics<parallel>, #tpu.dimension_semantics<arbitrary>], iteration_bounds = array<i64: 1, 1, 1>, scalar_prefetch = 0 : i64, scratch_operands = 1 : i64, tpu.core_type = #tpu.core_type<tc>, window_params = [{transform_indices = @transform_0, window_bounds = array<i64: 16, 64>}, {transform_indices = @transform_1, window_bounds = array<i64: 64, 32>}, {transform_indices = @transform_2, window_bounds = array<i64: 1, 32>}, {transform_indices = @transform_3, window_bounds = array<i64: 16, 32>}]} {
    %c0_i32 = arith.constant 0 : i32
    %0 = arith.cmpi eq, %arg2, %c0_i32 : i32
    %1 = arith.extui %0 : i1 to i32
    %c0_i32_0 = arith.constant 0 : i32
    %2 = arith.cmpi ne, %1, %c0_i32_0 : i32
    scf.if %2 {
      %cst_10 = arith.constant 0.000000e+00 : f32
      %12 = vector.broadcast %cst_10 : f32 to vector<16x32xf32>
      %c0_11 = arith.constant 0 : index
      %c0_12 = arith.constant 0 : index
      %13 = vector.load %arg7[%c0_11, %c0_12] : memref<16x32xf32, #tpu.memory_space<vmem>>, vector<16x32xf32>
      tpu.vector_store %arg7[%c0_11, %c0_12], %12 {strides = array<i32>} : memref<16x32xf32, #tpu.memory_space<vmem>>, vector<16x32xf32>,
    } else {
    }
    %c0 = arith.constant 0 : index
    %c0_1 = arith.constant 0 : index
    %3 = vector.load %arg7[%c0, %c0_1] : memref<16x32xf32, #tpu.memory_space<vmem>>, vector<16x32xf32>
    %c0_2 = arith.constant 0 : index
    %c0_3 = arith.constant 0 : index
    %4 = vector.load %arg3[%c0_2, %c0_3] : memref<16x64xbf16, #tpu.memory_space<vmem>>, vector<16x64xbf16>
    %c0_4 = arith.constant 0 : index
    %c0_5 = arith.constant 0 : index
    %5 = vector.load %arg4[%c0_4, %c0_5] : memref<64x32xbf16, #tpu.memory_space<vmem>>, vector<64x32xbf16>
    %cst = arith.constant dense<0.000000e+00> : vector<16x32xf32>
    %6 = tpu.matmul %4, %5, %cst {dimension_numbers = #tpu.dot_dimension_numbers<[1], [0], [0], [1], [0, 0, 1, 1], [], []>} : vector<16x64xbf16>, vector<64x32xbf16>, vector<16x32xf32> -> vector<16x32xf32>
    %7 = arith.addf %3, %6 : vector<16x32xf32>
    %c0_6 = arith.constant 0 : index
    %c0_7 = arith.constant 0 : index
    %8 = vector.load %arg7[%c0_6, %c0_7] : memref<16x32xf32, #tpu.memory_space<vmem>>, vector<16x32xf32>
    tpu.vector_store %arg7[%c0_6, %c0_7], %7 {strides = array<i32>} : memref<16x32xf32, #tpu.memory_space<vmem>>, vector<16x32xf32>,
    %c0_i32_8 = arith.constant 0 : i32
    %9 = arith.cmpi eq, %arg2, %c0_i32_8 : i32
    %10 = arith.extui %9 : i1 to i32
    %c0_i32_9 = arith.constant 0 : i32
    %11 = arith.cmpi ne, %10, %c0_i32_9 : i32
    scf.if %11 {
      %c0_10 = arith.constant 0 : index
      %c0_11 = arith.constant 0 : index
      %12 = vector.load %arg7[%c0_10, %c0_11] : memref<16x32xf32, #tpu.memory_space<vmem>>, vector<16x32xf32>
      %c0_12 = arith.constant 0 : index
      %c0_13 = arith.constant 0 : index
      %13 = vector.load %arg5[%c0_12, %c0_13] : memref<1x32xf32, #tpu.memory_space<vmem>>, vector<1x32xf32>
      %14 = vector.broadcast %13 : vector<1x32xf32> to vector<16x32xf32>
      %15 = arith.addf %12, %14 : vector<16x32xf32>
      %cst_14 = arith.constant 0.000000e+00 : f32
      %16 = vector.broadcast %cst_14 : f32 to vector<16x32xf32>
      %17 = arith.maximumf %15, %16 : vector<16x32xf32>
      %18 = arith.truncf %17 : vector<16x32xf32> to vector<16x32xbf16>
      %c0_15 = arith.constant 0 : index
      %c0_16 = arith.constant 0 : index
      %19 = vector.load %arg6[%c0_15, %c0_16] : memref<16x32xbf16, #tpu.memory_space<vmem>>, vector<16x32xbf16>
      tpu.vector_store %arg6[%c0_15, %c0_16], %18 {strides = array<i32>} : memref<16x32xbf16, #tpu.memory_space<vmem>>, vector<16x32xbf16>,
    } else {
    }
    return
  }
  func.func @transform_0(%arg0: i32, %arg1: i32, %arg2: i32) -> (i32, i32) {
    %c0_i32 = arith.constant 0 : i32
    return %arg0, %arg2 : i32, i32
  }
  func.func @transform_1(%arg0: i32, %arg1: i32, %arg2: i32) -> (i32, i32) {
    %c0_i32 = arith.constant 0 : i32
    return %arg2, %arg1 : i32, i32
  }
  func.func @transform_2(%arg0: i32, %arg1: i32, %arg2: i32) -> (i32, i32) {
    %c0_i32 = arith.constant 0 : i32
    %c0_i32_0 = arith.constant 0 : i32
    return %c0_i32, %arg1 : i32, i32
  }
  func.func @transform_3(%arg0: i32, %arg1: i32, %arg2: i32) -> (i32, i32) {
    %c0_i32 = arith.constant 0 : i32
    return %arg0, %arg1 : i32, i32
  }
}

</mosaic_0001>

<llo_original>
// kernel: tpu_custom_call.1
$region0: #{tpu_custom_call.1}
  #allocation0 [shape = 'u32[]', space=smem, size = 0x4, offset = 0x4, fixed_abs, tag = 'smem constant byte address 0x4 - core index']
  #allocation1 [shape = 'u32[72,128]{1,0:T(1,128)}', space=vmem, size = 0x9000, scoped, tag = 'internal scratch']
  #allocation2 [shape = 'f32[16,32]{1,0:T(8,128)}', space=vmem, size = 0x2000, scoped, tag = 'scratch operand']
  %s0 = inlined_call_operand.vmem [shape: bf16[16,64], index: 0, kind: input, shape index: {}]
  %s1 = inlined_call_operand.vmem [shape: bf16[64,32], index: 1, kind: input, shape index: {}]
  %s2 = inlined_call_operand.vmem [shape: f32[1,32], index: 2, kind: input, shape index: {}]
  %s3 = inlined_call_operand.hbm [shape: bf16[16,32], index: 3, kind: output, shape index: {}]
  %s4 = sld [smem:[#allocation0]]
  $region30: #{tpu_custom_call.1} parent=0
    _
  %s6 = ssub.s32 1, %s4
  %s7 = scalar_select 0, %s6, %s4
  $region1: #{tpu_custom_call.1} parent=0
    #allocation3 [shape = 'u8[4096]{0}', space=vmem, size = 0x1000, scoped, tag = 'output window, operand 0, single buffered']
    #allocation4 [shape = 's32[1]{0}', space=sflag, size = 0x4, scoped, tag = 'scoped memory for tpu_custom_call.1']
    %8 = vsyncpa [#allocation4], 0
    // Predicated region
    $region2: #{tpu_custom_call.1} parent=1 // pred_check
      _
    $region3: #{tpu_custom_call.1} parent=1 // pred_check_branch
      %10 = sbr.rel (0) target = $region5
    $region4: #{tpu_custom_call.1} parent=1 // pred_region
      _
    $region5: #{tpu_custom_call.1} parent=1 // pred_fallthru
      _
    // Predicated region
    $region6: #{tpu_custom_call.1} parent=1 // pred_check
      _
    $region7: #{tpu_custom_call.1} parent=1 // pred_check_branch
      %12 = sbr.rel (0) target = $region9
    $region8: #{tpu_custom_call.1} parent=1 // pred_region
      _
    $region9: #{tpu_custom_call.1} parent=1 // pred_fallthru
      _
    // Predicated region
    $region10: #{tpu_custom_call.1} parent=1 // pred_check
      _
    $region11: #{tpu_custom_call.1} parent=1 // pred_check_branch
      %14 = sbr.rel (0) target = $region13
    $region12: #{tpu_custom_call.1} parent=1 // pred_region
      _
    $region13: #{tpu_custom_call.1} parent=1 // pred_fallthru
      _
    %p16 = scmp.eq.s32.totalorder 0, 0
    // Predicated region
    $region14: #{tpu_custom_call.1} parent=1 // pred_check
      %p17 = pneg %p16
    $region15: #{tpu_custom_call.1} parent=1 // pred_check_branch
      %19 = sbr.rel (%p17) target = $region17
    $region16: #{tpu_custom_call.1} parent=1 // pred_region
      %vm20 = vcmask 261120
      %21 = vst.msk [vmem:[#allocation2] sm:$0xff] %vm20, 0.0
      %22 = vst.msk [vmem:[#allocation2 + $0x8] sm:$0xff] %vm20, 0.0
    $region17: #{tpu_custom_call.1} parent=1 // pred_fallthru
      _
    %v23 = vld [vmem:[#allocation2] sm:$0xff]
    %v24 = vld [vmem:[#allocation2 + $0x8] sm:$0xff]
    %v25 = vld [vmem:[%s0] sm:$0xf]
    %v26 = vld [vmem:[%s0 + $0x4] sm:$0xf]
    %v27 = vld [vmem:[%s1] sm:$0xf]
    %v28 = vld [vmem:[%s1 + $0x4] sm:$0xf]
    %v29 = vld [vmem:[%s1 + $0x8] sm:$0xf]
    %v30 = vld [vmem:[%s1 + $0xc] sm:$0xf]
    %v31 = vld [vmem:[%s1 + $0x10] sm:$0xf]
    %v32 = vld [vmem:[%s1 + $0x14] sm:$0xf]
    %v33 = vld [vmem:[%s1 + $0x18] sm:$0xf]
    %v34 = vld [vmem:[%s1 + $0x1c] sm:$0xf]
    %v37 = vunpack.c.l.b16 %v25
    %v38 = vunpack.c.l.b16 %v26
    %v39 = vpack.c.b16 %v38, %v37
    %v48 = vunpack.c.l.b16 %v27
    %v49 = vunpack.c.l.b16 %v28
    %v50 = vunpack.c.l.b16 %v29
    %v51 = vunpack.c.l.b16 %v30
    %v52 = vunpack.c.l.b16 %v31
    %v53 = vunpack.c.l.b16 %v32
    %v54 = vunpack.c.l.b16 %v33
    %v55 = vunpack.c.l.b16 %v34
    %v56 = vpack.c.b16 %v49, %v48
    %v57 = vpack.c.b16 %v51, %v50
    %v58 = vpack.c.b16 %v53, %v52
    %v59 = vpack.c.b16 %v55, %v54
    %vm64 = vcmask 523264
    %v66 = vsel %vm64, %v39, 0
    %68 = vmatpush.bf16.msra.mxu0 0
    %69 = vmatpush.bf16.msra.mxu0 0
    %70 = vmatpush.bf16.msra.mxu0 0
    %71 = vmatpush.bf16.msra.mxu0 0
    %72 = vmatpush.bf16.msra.mxu0 %v59
    %73 = vmatpush.bf16.msra.mxu0 %v58
    %74 = vmatpush.bf16.msra.mxu0 %v57
    %75 = vmatpush.bf16.msra.mxu0 %v56
    %76 = vmatmul.bf16.gmra.mxu0 %v66
    %v77 = vpop.f32.mrf.mxu0
    %v78 = vadd.f32 0.0, %v77
    %v79 = vpop.f32.mrf.mxu0
    %v80 = vadd.f32 0.0, %v79
    %81 = vdwg.mxu0
    %v82 = vadd.f32 %v23, %v78
    %v83 = vadd.f32 %v24, %v80
    %vm84 = vcmask 261120
    %85 = vst.msk [vmem:[#allocation2] sm:$0xff] %vm84, %v82
    %86 = vst.msk [vmem:[#allocation2 + $0x8] sm:$0xff] %vm84, %v83
    // Predicated region
    $region18: #{tpu_custom_call.1} parent=1 // pred_check
      %p87 = pneg %p16
    $region19: #{tpu_custom_call.1} parent=1 // pred_check_branch
      %89 = sbr.rel (%p87) target = $region21
    $region20: #{tpu_custom_call.1} parent=1 // pred_region
      %v90 = vld [vmem:[#allocation2] sm:$0xff]
      %v91 = vld [vmem:[#allocation2 + $0x8] sm:$0xff]
      %v92 = vld [vmem:[%s2] sm:$0x1]
      %v94 = vperm.slane %v92, 0
      %v96 = vadd.f32 %v90, %v94
      %v97 = vadd.f32 %v91, %v94
      %v98 = vmax.f32 %v96, 0.0
      %v99 = vmax.f32 %v97, 0.0
      %v100 = vpack.c.bf16 %v98, %v98
      %v101 = vpack.c.bf16 %v99, %v99
      %vm102 = vcmask 257024
      %103 = vst.msk [vmem:[#allocation3] sm:$0xf] %vm102, %v100
      %104 = vst.msk [vmem:[#allocation3 + $0x4] sm:$0xf] %vm102, %v101
    $region21: #{tpu_custom_call.1} parent=1 // pred_fallthru
      _
    // Predicated region
    $region22: #{tpu_custom_call.1} parent=1 // pred_check
      _
    $region23: #{tpu_custom_call.1} parent=1 // pred_check_branch
      %106 = sbr.rel (0) target = $region25
    $region24: #{tpu_custom_call.1} parent=1 // pred_region
      %108 = vsyncadd [#allocation4], 0
      %s109 = sshll.u32 [#allocation3], 4
      %s110 = int_to_ptr.vmem [resolvable:$true] %s109
      %s111 = sshll.u32 %s3, 4
      %s112 = int_to_ptr.hbm [resolvable:$true] %s111
      %117 = dma.vmem_to_hbm [thread:$0]  %s110, 128, %s112, [#allocation4], 64, 64, 4
    $region25: #{tpu_custom_call.1} parent=1 // pred_fallthru
      _
    // Predicated region
    $region26: #{tpu_custom_call.1} parent=1 // pred_check
      _
    $region27: #{tpu_custom_call.1} parent=1 // pred_check_branch
      %119 = sbr.rel (0) target = $region29
    $region28: #{tpu_custom_call.1} parent=1 // pred_region
      %121 = dma.done [#allocation4], 128
    $region29: #{tpu_custom_call.1} parent=1 // pred_fallthru
      _
    %122 = vsyncpa [#allocation4], 1

</llo_original>
